<compile_context>
chip_gen: v5e
topology: v5e:2x2
jax: 0.10.0
libtpu: 0.0.40
codegen_flags: <defaults>
</compile_context>

<pallas_src>
import functools

import jax
import jax.numpy as jnp
from jax.experimental import pallas as pl
from jax.experimental.pallas import tpu as pltpu


def _round_up(n, m):
    return ((n + m - 1) // m) * m


def _vae_kernel(x_ref, eps_ref,
                w1_ref, b1_ref,
                w2_ref, b2_ref,      # fused [w21 | w22], [b21 | b22]
                w3_ref, b3_ref,
                w4_ref, b4_ref,
                recon_ref, latent_ref, *, latent_p):
    # ----- encode: h1 = relu(x @ w1 + b1); x is already bf16 (pre-cast in wrapper)
    h1 = jnp.dot(x_ref[...], w1_ref[...],
                 preferred_element_type=jnp.float32) + b1_ref[...]
    h1 = jnp.maximum(h1, 0.0)

    # ----- fused mu / logvar head: one matmul, slice the f32 accumulator
    mv = jnp.dot(h1.astype(jnp.bfloat16), w2_ref[...],
                 preferred_element_type=jnp.float32) + b2_ref[...]
    mu = mv[:, :latent_p]
    logvar = mv[:, latent_p:]

    # ----- reparameterize (training branch); all element-wise math in f32
    std = jnp.exp(0.5 * logvar)
    latent = eps_ref[...].astype(jnp.float32) * std + mu
    latent_ref[...] = latent

    # ----- decode
    h3 = jnp.dot(latent.astype(jnp.bfloat16), w3_ref[...],
                 preferred_element_type=jnp.float32) + b3_ref[...]
    h3 = jnp.maximum(h3, 0.0)
    logits = jnp.dot(h3.astype(jnp.bfloat16), w4_ref[...],
                     preferred_element_type=jnp.float32) + b4_ref[...]
    recon_ref[...] = jax.nn.sigmoid(logits).astype(recon_ref.dtype)


def vae_forward(x, eps, params, *, batch_tile=256):
    """x: (B, x_dim) f32, eps: (B, latent_dim) f32, params: dict of (in,out) f32 weights.

    Returns (recon: (B, x_dim) bf16, latent: (B, latent_dim) f32).
    """
    B, x_dim = x.shape
    latent_dim = eps.shape[1]
    hdim = params["w1"].shape[1]

    f32, bf16 = jnp.float32, jnp.bfloat16

    # Lane-friendly padded feature sizes (zero padding keeps real columns exact).
    x_dim_p = _round_up(x_dim, 128)
    hdim_p = _round_up(hdim, 128)
    latent_p = _round_up(latent_dim, 128)

    # Batch tile: multiple of 16 (bf16 packs 16 sublanes per vreg).  Large tiles
    # amortize per-step overhead; split into >= 2 tiles for moderately large B
    # so the v7x second TensorCore (parallel grid axis) is not left idle.
    TB = min(batch_tile, _round_up(B, 16))
    if B >= 32 and _round_up(B, TB) // TB < 2:
        TB = max(16, _round_up((B + 1) // 2, 16))
    Bp = _round_up(B, TB)
    nb = Bp // TB

    def pad2(a, rows, cols, dtype):
        out = jnp.zeros((rows, cols), dtype)
        return out.at[:a.shape[0], :a.shape[1]].set(a.astype(dtype))

    def pad_bias(b, cols):
        out = jnp.zeros((1, cols), f32)
        return out.at[0, :b.shape[0]].set(b.astype(f32))

    # Matmul-only inputs go to the kernel in bf16 (halves their HBM traffic).
    x_p = pad2(x, Bp, x_dim_p, bf16)
    eps_p = pad2(eps, Bp, latent_p, bf16)

    w1 = pad2(params["w1"], x_dim_p, hdim_p, bf16)
    b1 = pad_bias(params["b1"], hdim_p)

    # Fused encoder head: [w21 | w22] laid out as (hdim_p, 2*latent_p).
    w2 = jnp.zeros((hdim_p, 2 * latent_p), bf16)
    w2 = w2.at[:hdim, :latent_dim].set(params["w21"].astype(bf16))
    w2 = w2.at[:hdim, latent_p:latent_p + latent_dim].set(params["w22"].astype(bf16))
    b2 = jnp.zeros((1, 2 * latent_p), f32)
    b2 = b2.at[0, :latent_dim].set(params["b21"].astype(f32))
    b2 = b2.at[0, latent_p:latent_p + latent_dim].set(params["b22"].astype(f32))

    w3 = pad2(params["w3"], latent_p, hdim_p, bf16)
    b3 = pad_bias(params["b3"], hdim_p)
    w4 = pad2(params["w4"], hdim_p, x_dim_p, bf16)
    b4 = pad_bias(params["b4"], x_dim_p)

    # Batch-blocked activations; weights/biases resident (constant index_map,
    # DMA elided on grid revisits).
    batch_spec = lambda cols: pl.BlockSpec((TB, cols), lambda i: (i, 0))
    const_spec = lambda arr: pl.BlockSpec(arr.shape, lambda i: (0, 0))

    in_specs = [
        batch_spec(x_dim_p), batch_spec(latent_p),
        const_spec(w1), const_spec(b1),
        const_spec(w2), const_spec(b2),
        const_spec(w3), const_spec(b3),
        const_spec(w4), const_spec(b4),
    ]
    out_specs = (batch_spec(x_dim_p), batch_spec(latent_p))

    # Cost estimate on real (unpadded) work; bytes from the actual arrays moved.
    flops = 2 * B * (x_dim * hdim + hdim * 2 * latent_dim
                     + latent_dim * hdim + hdim * x_dim)
    transcendentals = B * (latent_dim + x_dim)          # exp + sigmoid
    bytes_accessed = int(
        x_p.size * 2 + eps_p.size * 2
        + (w1.size + w2.size + w3.size + w4.size) * 2
        + (b1.size + b2.size + b3.size + b4.size) * 4
        + Bp * x_dim_p * 2          # recon (bf16)
        + Bp * latent_p * 4         # latent (f32)
    )

    # VMEM budget guard: only relevant if TB is pushed very large (v5e's default
    # scoped-VMEM limit is 16 MiB).  Weights total < 0.2 MiB, never binding.
    weight_bytes = sum(int(a.size) * a.dtype.itemsize
                       for a in (w1, b1, w2, b2, w3, b3, w4, b4))
    io_bytes = 2 * TB * (x_dim_p * 2 + latent_p * 2           # in (bf16, 2-buf)
                         + x_dim_p * 2 + latent_p * 4)        # out (2-buf)
    scratch_bytes = TB * (hdim_p + 2 * latent_p + hdim_p + x_dim_p) * 4
    vmem_est = 2 * weight_bytes + io_bytes + scratch_bytes
    compiler_kwargs = dict(dimension_semantics=("parallel",))
    if vmem_est > 12 * (1 << 20):
        compiler_kwargs["vmem_limit_bytes"] = int(min(1.5 * vmem_est, 100 << 20))

    kernel = functools.partial(_vae_kernel, latent_p=latent_p)

    recon_pad, latent_pad = pl.pallas_call(
        kernel,
        out_shape=(
            jax.ShapeDtypeStruct((Bp, x_dim_p), bf16),
            jax.ShapeDtypeStruct((Bp, latent_p), f32),
        ),
        grid_spec=pltpu.PrefetchScalarGridSpec(
            num_scalar_prefetch=0,
            grid=(nb,),
            in_specs=in_specs,
            out_specs=out_specs,
        ),
        compiler_params=pltpu.CompilerParams(**compiler_kwargs),
        cost_estimate=pl.CostEstimate(
            flops=flops,
            transcendentals=transcendentals,
            bytes_accessed=bytes_accessed,
        ),
    )(x_p, eps_p, w1, b1, w2, b2, w3, b3, w4, b4)

    return recon_pad[:B, :x_dim], latent_pad[:B, :latent_dim]


def init_params(key, x_dim, hdim, latent_dim):
    """Deterministic init; weights stored as (in_features, out_features), f32."""
    ks = jax.random.split(key, 10)

    def linear(kw, kb, fan_in, fan_out):
        bound = 1.0 / jnp.sqrt(fan_in)   # PyTorch nn.Linear default init range
        w = jax.random.uniform(kw, (fan_in, fan_out), jnp.float32, -bound, bound)
        b = jax.random.uniform(kb, (fan_out,), jnp.float32, -bound, bound)
        return w, b

    w1, b1 = linear(ks[0], ks[1], x_dim, hdim)
    w21, b21 = linear(ks[2], ks[3], hdim, latent_dim)
    w22, b22 = linear(ks[4], ks[5], hdim, latent_dim)
    w3, b3 = linear(ks[6], ks[7], latent_dim, hdim)
    w4, b4 = linear(ks[8], ks[9], hdim, x_dim)
    return dict(w1=w1, b1=b1, w21=w21, b21=b21, w22=w22, b22=b22,
                w3=w3, b3=b3, w4=w4, b4=b4)


def _reference(x, eps, params, matmul_dtype):
    """Plain-JAX reference with the kernel's mixed precision (f32 accumulation)."""
    md = matmul_dtype
    mm = lambda a, w: jnp.dot(a.astype(md), w.astype(md),
                              preferred_element_type=jnp.float32)
    h1 = jnp.maximum(mm(x, params["w1"]) + params["b1"], 0.0)
    mu = mm(h1, params["w21"]) + params["b21"]
    logvar = mm(h1, params["w22"]) + params["b22"]
    lat = eps.astype(jnp.float32) * jnp.exp(0.5 * logvar) + mu
    h3 = jnp.maximum(mm(lat, params["w3"]) + params["b3"], 0.0)
    rec = jax.nn.sigmoid(mm(h3, params["w4"]) + params["b4"])
    return rec, lat


if __name__ == "__main__":
    key = jax.random.PRNGKey(0)
    k_x, k_eps, k_p = jax.random.split(key, 3)

    B, x_dim, hdim, latent_dim = 8, 64, 50, 5

    x = jax.random.uniform(k_x, (B, x_dim), jnp.float32)          # pixel-like input
    eps = jax.random.normal(k_eps, (B, latent_dim), jnp.float32)  # reparam noise
    params = init_params(k_p, x_dim, hdim, latent_dim)

    recon, latent = vae_forward(x, eps, params)
    jax.block_until_ready((recon, latent))
    recon_f32 = recon.astype(jnp.float32)

    # Matched-precision reference (bf16 matmuls + bf16-rounded eps, f32 accumulation)
    eps_bf = eps.astype(jnp.bfloat16).astype(jnp.float32)
    rec_ref, lat_ref = _reference(x, eps_bf, params, jnp.bfloat16)
    assert jnp.allclose(recon_f32, rec_ref, atol=1e-2, rtol=1e-2), "recon mismatch (bf16 ref)"
    assert jnp.allclose(latent, lat_ref, atol=1e-2, rtol=1e-2), "latent mismatch (bf16 ref)"

    # Loose check vs. full-f32 semantics of the PyTorch module
    rec_f, lat_f = _reference(x, eps, params, jnp.float32)
    assert jnp.allclose(recon_f32, rec_f, atol=5e-2), "recon diverges from f32 semantics"
    assert jnp.allclose(latent, lat_f, atol=5e-2), "latent diverges from f32 semantics"

    print("KERNEL_OK")
</pallas_src>

<mosaic_0001>
module attributes {stable_mosaic.version = 11 : i64} {
  func.func @_vae_kernel(%arg0: i32, %arg1: memref<16x128xbf16, #tpu.memory_space<vmem>>, %arg2: memref<16x128xbf16, #tpu.memory_space<vmem>>, %arg3: memref<128x128xbf16, #tpu.memory_space<vmem>>, %arg4: memref<1x128xf32, #tpu.memory_space<vmem>>, %arg5: memref<128x256xbf16, #tpu.memory_space<vmem>>, %arg6: memref<1x256xf32, #tpu.memory_space<vmem>>, %arg7: memref<128x128xbf16, #tpu.memory_space<vmem>>, %arg8: memref<1x128xf32, #tpu.memory_space<vmem>>, %arg9: memref<128x128xbf16, #tpu.memory_space<vmem>>, %arg10: memref<1x128xf32, #tpu.memory_space<vmem>>, %arg11: memref<16x128xbf16, #tpu.memory_space<vmem>>, %arg12: memref<16x128xf32, #tpu.memory_space<vmem>>) attributes {dimension_semantics = [#tpu.dimension_semantics<parallel>], iteration_bounds = array<i64: 1>, scalar_prefetch = 0 : i64, scratch_operands = 0 : i64, tpu.core_type = #tpu.core_type<tc>, window_params = [{transform_indices = @transform_0, window_bounds = array<i64: 16, 128>}, {transform_indices = @transform_1, window_bounds = array<i64: 16, 128>}, {pipeline_mode = #tpu.pipeline_mode<synchronous>, transform_indices = @transform_2, window_bounds = array<i64: 128, 128>}, {pipeline_mode = #tpu.pipeline_mode<synchronous>, transform_indices = @transform_3, window_bounds = array<i64: 1, 128>}, {pipeline_mode = #tpu.pipeline_mode<synchronous>, transform_indices = @transform_4, window_bounds = array<i64: 128, 256>}, {pipeline_mode = #tpu.pipeline_mode<synchronous>, transform_indices = @transform_5, window_bounds = array<i64: 1, 256>}, {pipeline_mode = #tpu.pipeline_mode<synchronous>, transform_indices = @transform_6, window_bounds = array<i64: 128, 128>}, {pipeline_mode = #tpu.pipeline_mode<synchronous>, transform_indices = @transform_7, window_bounds = array<i64: 1, 128>}, {pipeline_mode = #tpu.pipeline_mode<synchronous>, transform_indices = @transform_8, window_bounds = array<i64: 128, 128>}, {pipeline_mode = #tpu.pipeline_mode<synchronous>, transform_indices = @transform_9, window_bounds = array<i64: 1, 128>}, {transform_indices = @transform_10, window_bounds = array<i64: 16, 128>}, {transform_indices = @transform_11, window_bounds = array<i64: 16, 128>}]} {
    %c0 = arith.constant 0 : index
    %c0_0 = arith.constant 0 : index
    %0 = vector.load %arg1[%c0, %c0_0] : memref<16x128xbf16, #tpu.memory_space<vmem>>, vector<16x128xbf16>
    %c0_1 = arith.constant 0 : index
    %c0_2 = arith.constant 0 : index
    %1 = vector.load %arg3[%c0_1, %c0_2] : memref<128x128xbf16, #tpu.memory_space<vmem>>, vector<128x128xbf16>
    %cst = arith.constant dense<0.000000e+00> : vector<16x128xf32>
    %2 = tpu.matmul %0, %1, %cst {dimension_numbers = #tpu.dot_dimension_numbers<[1], [0], [0], [1], [0, 0, 1, 1], [], []>} : vector<16x128xbf16>, vector<128x128xbf16>, vector<16x128xf32> -> vector<16x128xf32>
    %c0_3 = arith.constant 0 : index
    %c0_4 = arith.constant 0 : index
    %3 = vector.load %arg4[%c0_3, %c0_4] : memref<1x128xf32, #tpu.memory_space<vmem>>, vector<1x128xf32>
    %4 = vector.broadcast %3 : vector<1x128xf32> to vector<16x128xf32>
    %5 = arith.addf %2, %4 : vector<16x128xf32>
    %cst_5 = arith.constant 0.000000e+00 : f32
    %6 = vector.broadcast %cst_5 : f32 to vector<16x128xf32>
    %7 = arith.maximumf %5, %6 : vector<16x128xf32>
    %8 = arith.truncf %7 : vector<16x128xf32> to vector<16x128xbf16>
    %c0_6 = arith.constant 0 : index
    %c0_7 = arith.constant 0 : index
    %9 = vector.load %arg5[%c0_6, %c0_7] : memref<128x256xbf16, #tpu.memory_space<vmem>>, vector<128x256xbf16>
    %cst_8 = arith.constant dense<0.000000e+00> : vector<16x256xf32>
    %10 = tpu.matmul %8, %9, %cst_8 {dimension_numbers = #tpu.dot_dimension_numbers<[1], [0], [0], [1], [0, 0, 1, 1], [], []>} : vector<16x128xbf16>, vector<128x256xbf16>, vector<16x256xf32> -> vector<16x256xf32>
    %c0_9 = arith.constant 0 : index
    %c0_10 = arith.constant 0 : index
    %11 = vector.load %arg6[%c0_9, %c0_10] : memref<1x256xf32, #tpu.memory_space<vmem>>, vector<1x256xf32>
    %12 = vector.broadcast %11 : vector<1x256xf32> to vector<16x256xf32>
    %13 = arith.addf %10, %12 : vector<16x256xf32>
    %14 = vector.extract_strided_slice %13 {offsets = [0, 0], sizes = [16, 128], strides = [1, 1]} : vector<16x256xf32> to vector<16x128xf32>
    %15 = vector.extract_strided_slice %13 {offsets = [0, 128], sizes = [16, 128], strides = [1, 1]} : vector<16x256xf32> to vector<16x128xf32>
    %cst_11 = arith.constant 5.000000e-01 : f32
    %16 = vector.broadcast %cst_11 : f32 to vector<16x128xf32>
    %17 = arith.mulf %16, %15 : vector<16x128xf32>
    %18 = math.exp %17 : vector<16x128xf32>
    %c0_12 = arith.constant 0 : index
    %c0_13 = arith.constant 0 : index
    %19 = vector.load %arg2[%c0_12, %c0_13] : memref<16x128xbf16, #tpu.memory_space<vmem>>, vector<16x128xbf16>
    %20 = arith.extf %19 : vector<16x128xbf16> to vector<16x128xf32>
    %21 = arith.mulf %20, %18 : vector<16x128xf32>
    %22 = arith.addf %21, %14 : vector<16x128xf32>
    %c0_14 = arith.constant 0 : index
    %c0_15 = arith.constant 0 : index
    %23 = vector.load %arg12[%c0_14, %c0_15] : memref<16x128xf32, #tpu.memory_space<vmem>>, vector<16x128xf32>
    tpu.vector_store %arg12[%c0_14, %c0_15], %22 {strides = array<i32>} : memref<16x128xf32, #tpu.memory_space<vmem>>, vector<16x128xf32>,
    %24 = arith.truncf %22 : vector<16x128xf32> to vector<16x128xbf16>
    %c0_16 = arith.constant 0 : index
    %c0_17 = arith.constant 0 : index
    %25 = vector.load %arg7[%c0_16, %c0_17] : memref<128x128xbf16, #tpu.memory_space<vmem>>, vector<128x128xbf16>
    %cst_18 = arith.constant dense<0.000000e+00> : vector<16x128xf32>
    %26 = tpu.matmul %24, %25, %cst_18 {dimension_numbers = #tpu.dot_dimension_numbers<[1], [0], [0], [1], [0, 0, 1, 1], [], []>} : vector<16x128xbf16>, vector<128x128xbf16>, vector<16x128xf32> -> vector<16x128xf32>
    %c0_19 = arith.constant 0 : index
    %c0_20 = arith.constant 0 : index
    %27 = vector.load %arg8[%c0_19, %c0_20] : memref<1x128xf32, #tpu.memory_space<vmem>>, vector<1x128xf32>
    %28 = vector.broadcast %27 : vector<1x128xf32> to vector<16x128xf32>
    %29 = arith.addf %26, %28 : vector<16x128xf32>
    %cst_21 = arith.constant 0.000000e+00 : f32
    %30 = vector.broadcast %cst_21 : f32 to vector<16x128xf32>
    %31 = arith.maximumf %29, %30 : vector<16x128xf32>
    %32 = arith.truncf %31 : vector<16x128xf32> to vector<16x128xbf16>
    %c0_22 = arith.constant 0 : index
    %c0_23 = arith.constant 0 : index
    %33 = vector.load %arg9[%c0_22, %c0_23] : memref<128x128xbf16, #tpu.memory_space<vmem>>, vector<128x128xbf16>
    %cst_24 = arith.constant dense<0.000000e+00> : vector<16x128xf32>
    %34 = tpu.matmul %32, %33, %cst_24 {dimension_numbers = #tpu.dot_dimension_numbers<[1], [0], [0], [1], [0, 0, 1, 1], [], []>} : vector<16x128xbf16>, vector<128x128xbf16>, vector<16x128xf32> -> vector<16x128xf32>
    %c0_25 = arith.constant 0 : index
    %c0_26 = arith.constant 0 : index
    %35 = vector.load %arg10[%c0_25, %c0_26] : memref<1x128xf32, #tpu.memory_space<vmem>>, vector<1x128xf32>
    %36 = vector.broadcast %35 : vector<1x128xf32> to vector<16x128xf32>
    %37 = arith.addf %34, %36 : vector<16x128xf32>
    %38 = arith.negf %37 : vector<16x128xf32>
    %39 = math.exp %38 : vector<16x128xf32>
    %cst_27 = arith.constant 1.000000e+00 : f32
    %40 = vector.broadcast %cst_27 : f32 to vector<16x128xf32>
    %41 = arith.addf %40, %39 : vector<16x128xf32>
    %42 = arith.divf %40, %41 : vector<16x128xf32>
    %43 = arith.truncf %42 : vector<16x128xf32> to vector<16x128xbf16>
    %c0_28 = arith.constant 0 : index
    %c0_29 = arith.constant 0 : index
    %44 = vector.load %arg11[%c0_28, %c0_29] : memref<16x128xbf16, #tpu.memory_space<vmem>>, vector<16x128xbf16>
    tpu.vector_store %arg11[%c0_28, %c0_29], %43 {strides = array<i32>} : memref<16x128xbf16, #tpu.memory_space<vmem>>, vector<16x128xbf16>,
    return
  }
  func.func @transform_0(%arg0: i32) -> (i32, i32) {
    %c0_i32 = arith.constant 0 : i32
    %c0_i32_0 = arith.constant 0 : i32
    return %arg0, %c0_i32 : i32, i32
  }
  func.func @transform_1(%arg0: i32) -> (i32, i32) {
    %c0_i32 = arith.constant 0 : i32
    %c0_i32_0 = arith.constant 0 : i32
    return %arg0, %c0_i32 : i32, i32
  }
  func.func @transform_2(%arg0: i32) -> (i32, i32) {
    %c0_i32 = arith.constant 0 : i32
    %c0_i32_0 = arith.constant 0 : i32
    %c0_i32_1 = arith.constant 0 : i32
    return %c0_i32, %c0_i32_0 : i32, i32
  }
  func.func @transform_3(%arg0: i32) -> (i32, i32) {
    %c0_i32 = arith.constant 0 : i32
    %c0_i32_0 = arith.constant 0 : i32
    %c0_i32_1 = arith.constant 0 : i32
    return %c0_i32, %c0_i32_0 : i32, i32
  }
  func.func @transform_4(%arg0: i32) -> (i32, i32) {
    %c0_i32 = arith.constant 0 : i32
    %c0_i32_0 = arith.constant 0 : i32
    %c0_i32_1 = arith.constant 0 : i32
    return %c0_i32, %c0_i32_0 : i32, i32
  }
  func.func @transform_5(%arg0: i32) -> (i32, i32) {
    %c0_i32 = arith.constant 0 : i32
    %c0_i32_0 = arith.constant 0 : i32
    %c0_i32_1 = arith.constant 0 : i32
    return %c0_i32, %c0_i32_0 : i32, i32
  }
  func.func @transform_6(%arg0: i32) -> (i32, i32) {
    %c0_i32 = arith.constant 0 : i32
    %c0_i32_0 = arith.constant 0 : i32
    %c0_i32_1 = arith.constant 0 : i32
    return %c0_i32, %c0_i32_0 : i32, i32
  }
  func.func @transform_7(%arg0: i32) -> (i32, i32) {
    %c0_i32 = arith.constant 0 : i32
    %c0_i32_0 = arith.constant 0 : i32
    %c0_i32_1 = arith.constant 0 : i32
    return %c0_i32, %c0_i32_0 : i32, i32
  }
  func.func @transform_8(%arg0: i32) -> (i32, i32) {
    %c0_i32 = arith.constant 0 : i32
    %c0_i32_0 = arith.constant 0 : i32
    %c0_i32_1 = arith.constant 0 : i32
    return %c0_i32, %c0_i32_0 : i32, i32
  }
  func.func @transform_9(%arg0: i32) -> (i32, i32) {
    %c0_i32 = arith.constant 0 : i32
    %c0_i32_0 = arith.constant 0 : i32
    %c0_i32_1 = arith.constant 0 : i32
    return %c0_i32, %c0_i32_0 : i32, i32
  }
  func.func @transform_10(%arg0: i32) -> (i32, i32) {
    %c0_i32 = arith.constant 0 : i32
    %c0_i32_0 = arith.constant 0 : i32
    return %arg0, %c0_i32 : i32, i32
  }
  func.func @transform_11(%arg0: i32) -> (i32, i32) {
    %c0_i32 = arith.constant 0 : i32
    %c0_i32_0 = arith.constant 0 : i32
    return %arg0, %c0_i32 : i32, i32
  }
}

</mosaic_0001>

<llo_original>
// kernel: tpu_custom_call.1
$region0: #{tpu_custom_call.1}
  #allocation0 [shape = 'u32[]', space=smem, size = 0x4, offset = 0x4, fixed_abs, tag = 'smem constant byte address 0x4 - core index']
  #allocation1 [shape = 'u32[72,128]{1,0:T(1,128)}', space=vmem, size = 0x9000, scoped, tag = 'internal scratch']
  %s0 = inlined_call_operand.hbm [shape: bf16[16,128], index: 0, kind: input, shape index: {}]
  %s1 = inlined_call_operand.hbm [shape: bf16[16,128], index: 1, kind: input, shape index: {}]
  %s2 = inlined_call_operand.hbm [shape: bf16[128,128], index: 2, kind: input, shape index: {}]
  %s3 = inlined_call_operand.vmem [shape: f32[1,128], index: 3, kind: input, shape index: {}]
  %s4 = inlined_call_operand.hbm [shape: bf16[128,256], index: 4, kind: input, shape index: {}]
  %s5 = inlined_call_operand.vmem [shape: f32[1,256], index: 5, kind: input, shape index: {}]
  %s6 = inlined_call_operand.hbm [shape: bf16[128,128], index: 6, kind: input, shape index: {}]
  %s7 = inlined_call_operand.vmem [shape: f32[1,128], index: 7, kind: input, shape index: {}]
  %s8 = inlined_call_operand.hbm [shape: bf16[128,128], index: 8, kind: input, shape index: {}]
  %s9 = inlined_call_operand.vmem [shape: f32[1,128], index: 9, kind: input, shape index: {}]
  %s10 = inlined_call_operand.hbm [shape: bf16[16,128], index: 10, kind: output, shape index: {0}]
  %s11 = inlined_call_operand.hbm [shape: f32[16,128], index: 11, kind: output, shape index: {1}]
  %12 = xla_tuple %s10, %s11
  %s13 = sld [smem:[#allocation0]]
  $region82: #{tpu_custom_call.1} parent=0
    _
  %s15 = ssub.s32 1, %s13
  %s16 = scalar_select 0, %s15, %s13
  $region1: #{tpu_custom_call.1} parent=0
    #allocation2 [shape = 'u8[4096]{0}', space=vmem, size = 0x1000, scoped, tag = 'input window, operand 0, single buffered']
    #allocation3 [shape = 's32[1]{0}', space=sflag, size = 0x4, scoped, tag = 'scoped memory for tpu_custom_call.1']
    #allocation4 [shape = 's32[1]{0}', space=sflag, size = 0x4, scoped, tag = 'scoped memory for tpu_custom_call.1']
    #allocation5 [shape = 'u8[4096]{0}', space=vmem, size = 0x1000, scoped, tag = 'input window, operand 1, single buffered']
    #allocation6 [shape = 's32[1]{0}', space=sflag, size = 0x4, scoped, tag = 'scoped memory for tpu_custom_call.1']
    #allocation7 [shape = 'u8[32768]{0}', space=vmem, size = 0x8000, scoped, tag = 'input window, operand 2, single buffered']
    #allocation8 [shape = 'u8[65536]{0}', space=vmem, size = 0x10000, scoped, tag = 'input window, operand 4, single buffered']
    #allocation9 [shape = 's32[1]{0}', space=sflag, size = 0x4, scoped, tag = 'scoped memory for tpu_custom_call.1']
    #allocation10 [shape = 'u8[32768]{0}', space=vmem, size = 0x8000, scoped, tag = 'input window, operand 6, single buffered']
    #allocation11 [shape = 'u8[32768]{0}', space=vmem, size = 0x8000, scoped, tag = 'input window, operand 8, single buffered']
    #allocation12 [shape = 's32[1]{0}', space=sflag, size = 0x4, scoped, tag = 'scoped memory for tpu_custom_call.1']
    #allocation13 [shape = 'u8[4096]{0}', space=vmem, size = 0x1000, scoped, tag = 'output window, operand 0, single buffered']
    #allocation14 [shape = 'u8[8192]{0}', space=vmem, size = 0x2000, scoped, tag = 'output window, operand 1, single buffered']
    #allocation15 [shape = 's32[1]{0}', space=sflag, size = 0x4, scoped, tag = 'scoped memory for tpu_custom_call.1']
    %17 = vsyncpa [#allocation3], 0
    %18 = vsyncpa [#allocation6], 0
    %19 = vsyncpa [#allocation9], 0
    %20 = vsyncpa [#allocation12], 0
    %21 = vsyncpa [#allocation4], 0
    %22 = vsyncpa [#allocation15], 0
    // Predicated region
    $region2: #{tpu_custom_call.1} parent=1 // pred_check
      _
    $region3: #{tpu_custom_call.1} parent=1 // pred_check_branch
      %24 = sbr.rel (0) target = $region5
    $region4: #{tpu_custom_call.1} parent=1 // pred_region
      %26 = vsyncadd [#allocation3], 0
      %s27 = sshll.u32 %s0, 4
      %s28 = int_to_ptr.hbm [resolvable:$true] %s27
      %s29 = sshll.u32 [#allocation2], 4
      %s30 = int_to_ptr.vmem [resolvable:$true] %s29
      %35 = dma.hbm_to_vmem [thread:$0]  %s28, 128, %s30, [#allocation3], 64, 64, 4
    $region5: #{tpu_custom_call.1} parent=1 // pred_fallthru
      _
    // Predicated region
    $region6: #{tpu_custom_call.1} parent=1 // pred_check
      _
    $region7: #{tpu_custom_call.1} parent=1 // pred_check_branch
      %37 = sbr.rel (0) target = $region9
    $region8: #{tpu_custom_call.1} parent=1 // pred_region
      %39 = vsyncadd [#allocation6], 0
      %s40 = sshll.u32 %s1, 4
      %s41 = int_to_ptr.hbm [resolvable:$true] %s40
      %s42 = sshll.u32 [#allocation5], 4
      %s43 = int_to_ptr.vmem [resolvable:$true] %s42
      %48 = dma.hbm_to_vmem [thread:$0]  %s41, 128, %s43, [#allocation6], 64, 64, 4
    $region9: #{tpu_custom_call.1} parent=1 // pred_fallthru
      _
    // Predicated region
    $region10: #{tpu_custom_call.1} parent=1 // pred_check
      _
    $region11: #{tpu_custom_call.1} parent=1 // pred_check_branch
      %50 = sbr.rel (0) target = $region13
    $region12: #{tpu_custom_call.1} parent=1 // pred_region
      %52 = vsyncadd [#allocation6], 0
      %s53 = sshll.u32 %s2, 4
      %s54 = int_to_ptr.hbm [resolvable:$true] %s53
      %s55 = sshll.u32 [#allocation7], 4
      %s56 = int_to_ptr.vmem [resolvable:$true] %s55
      %61 = dma.hbm_to_vmem [thread:$0]  %s54, 1024, %s56, [#allocation6], 64, 64, 4
    $region13: #{tpu_custom_call.1} parent=1 // pred_fallthru
      _
    // Predicated region
    $region14: #{tpu_custom_call.1} parent=1 // pred_check
      _
    $region15: #{tpu_custom_call.1} parent=1 // pred_check_branch
      %63 = sbr.rel (0) target = $region17
    $region16: #{tpu_custom_call.1} parent=1 // pred_region
      _
    $region17: #{tpu_custom_call.1} parent=1 // pred_fallthru
      _
    // Predicated region
    $region18: #{tpu_custom_call.1} parent=1 // pred_check
      _
    $region19: #{tpu_custom_call.1} parent=1 // pred_check_branch
      %65 = sbr.rel (0) target = $region21
    $region20: #{tpu_custom_call.1} parent=1 // pred_region
      %67 = vsyncadd [#allocation9], 0
      %s68 = sshll.u32 %s4, 4
      %s69 = int_to_ptr.hbm [resolvable:$true] %s68
      %s70 = sshll.u32 [#allocation8], 4
      %s71 = int_to_ptr.vmem [resolvable:$true] %s70
      %76 = dma.hbm_to_vmem [thread:$0]  %s69, 2048, %s71, [#allocation9], 128, 128, 8
    $region21: #{tpu_custom_call.1} parent=1 // pred_fallthru
      _
    // Predicated region
    $region22: #{tpu_custom_call.1} parent=1 // pred_check
      _
    $region23: #{tpu_custom_call.1} parent=1 // pred_check_branch
      %78 = sbr.rel (0) target = $region25
    $region24: #{tpu_custom_call.1} parent=1 // pred_region
      _
    $region25: #{tpu_custom_call.1} parent=1 // pred_fallthru
      _
    // Predicated region
    $region26: #{tpu_custom_call.1} parent=1 // pred_check
      _
    $region27: #{tpu_custom_call.1} parent=1 // pred_check_branch
      %80 = sbr.rel (0) target = $region29
    $region28: #{tpu_custom_call.1} parent=1 // pred_region
      %82 = vsyncadd [#allocation9], 0
      %s83 = sshll.u32 %s6, 4
      %s84 = int_to_ptr.hbm [resolvable:$true] %s83
      %s85 = sshll.u32 [#allocation10], 4
      %s86 = int_to_ptr.vmem [resolvable:$true] %s85
      %91 = dma.hbm_to_vmem [thread:$0]  %s84, 1024, %s86, [#allocation9], 64, 64, 4
    $region29: #{tpu_custom_call.1} parent=1 // pred_fallthru
      _
    // Predicated region
    $region30: #{tpu_custom_call.1} parent=1 // pred_check
      _
    $region31: #{tpu_custom_call.1} parent=1 // pred_check_branch
      %93 = sbr.rel (0) target = $region33
    $region32: #{tpu_custom_call.1} parent=1 // pred_region
      _
    $region33: #{tpu_custom_call.1} parent=1 // pred_fallthru
      _
    // Predicated region
    $region34: #{tpu_custom_call.1} parent=1 // pred_check
      _
    $region35: #{tpu_custom_call.1} parent=1 // pred_check_branch
      %95 = sbr.rel (0) target = $region37
    $region36: #{tpu_custom_call.1} parent=1 // pred_region
      %97 = vsyncadd [#allocation12], 0
      %s98 = sshll.u32 %s8, 4
      %s99 = int_to_ptr.hbm [resolvable:$true] %s98
      %s100 = sshll.u32 [#allocation11], 4
      %s101 = int_to_ptr.vmem [resolvable:$true] %s100
      %106 = dma.hbm_to_vmem [thread:$0]  %s99, 1024, %s101, [#allocation12], 64, 64, 4
    $region37: #{tpu_custom_call.1} parent=1 // pred_fallthru
      _
    // Predicated region
    $region38: #{tpu_custom_call.1} parent=1 // pred_check
      _
    $region39: #{tpu_custom_call.1} parent=1 // pred_check_branch
      %108 = sbr.rel (0) target = $region41
    $region40: #{tpu_custom_call.1} parent=1 // pred_region
      _
    $region41: #{tpu_custom_call.1} parent=1 // pred_fallthru
      _
    // Predicated region
    $region42: #{tpu_custom_call.1} parent=1 // pred_check
      _
    $region43: #{tpu_custom_call.1} parent=1 // pred_check_branch
      %110 = sbr.rel (0) target = $region45
    $region44: #{tpu_custom_call.1} parent=1 // pred_region
      %112 = dma.done [#allocation3], 128
    $region45: #{tpu_custom_call.1} parent=1 // pred_fallthru
      _
    // Predicated region
    $region46: #{tpu_custom_call.1} parent=1 // pred_check
      _
    $region47: #{tpu_custom_call.1} parent=1 // pred_check_branch
      %114 = sbr.rel (0) target = $region49
    $region48: #{tpu_custom_call.1} parent=1 // pred_region
      %116 = dma.done [#allocation6], 128
    $region49: #{tpu_custom_call.1} parent=1 // pred_fallthru
      _
    // Predicated region
    $region50: #{tpu_custom_call.1} parent=1 // pred_check
      _
    $region51: #{tpu_custom_call.1} parent=1 // pred_check_branch
      %118 = sbr.rel (0) target = $region53
    $region52: #{tpu_custom_call.1} parent=1 // pred_region
      %120 = dma.done [#allocation6], 1024
    $region53: #{tpu_custom_call.1} parent=1 // pred_fallthru
      _
    // Predicated region
    $region54: #{tpu_custom_call.1} parent=1 // pred_check
      _
    $region55: #{tpu_custom_call.1} parent=1 // pred_check_branch
      %122 = sbr.rel (0) target = $region57
    $region56: #{tpu_custom_call.1} parent=1 // pred_region
      %124 = dma.done [#allocation9], 2048
    $region57: #{tpu_custom_call.1} parent=1 // pred_fallthru
      _
    // Predicated region
    $region58: #{tpu_custom_call.1} parent=1 // pred_check
      _
    $region59: #{tpu_custom_call.1} parent=1 // pred_check_branch
      %126 = sbr.rel (0) target = $region61
    $region60: #{tpu_custom_call.1} parent=1 // pred_region
      %128 = dma.done [#allocation9], 1024
    $region61: #{tpu_custom_call.1} parent=1 // pred_fallthru
      _
    // Predicated region
    $region62: #{tpu_custom_call.1} parent=1 // pred_check
      _
    $region63: #{tpu_custom_call.1} parent=1 // pred_check_branch
      %130 = sbr.rel (0) target = $region65
    $region64: #{tpu_custom_call.1} parent=1 // pred_region
      %132 = dma.done [#allocation12], 1024
    $region65: #{tpu_custom_call.1} parent=1 // pred_fallthru
      _
    %v133 = vld [vmem:[#allocation2] sm:$0xf]
    %v134 = vld [vmem:[#allocation2 + $0x4] sm:$0xf]
    %v135 = vld [vmem:[#allocation7] sm:$0xf]
    %v136 = vld [vmem:[#allocation7 + $0x4] sm:$0xf]
    %v137 = vld [vmem:[#allocation7 + $0x8] sm:$0xf]
    %v138 = vld [vmem:[#allocation7 + $0xc] sm:$0xf]
    %v139 = vld [vmem:[#allocation7 + $0x10] sm:$0xf]
    %v140 = vld [vmem:[#allocation7 + $0x14] sm:$0xf]
    %v141 = vld [vmem:[#allocation7 + $0x18] sm:$0xf]
    %v142 = vld [vmem:[#allocation7 + $0x1c] sm:$0xf]
    %v143 = vld [vmem:[#allocation7 + $0x20] sm:$0xf]
    %v144 = vld [vmem:[#allocation7 + $0x24] sm:$0xf]
    %v145 = vld [vmem:[#allocation7 + $0x28] sm:$0xf]
    %v146 = vld [vmem:[#allocation7 + $0x2c] sm:$0xf]
    %v147 = vld [vmem:[#allocation7 + $0x30] sm:$0xf]
    %v148 = vld [vmem:[#allocation7 + $0x34] sm:$0xf]
    %v149 = vld [vmem:[#allocation7 + $0x38] sm:$0xf]
    %v150 = vld [vmem:[#allocation7 + $0x3c] sm:$0xf]
    %v151 = vld [vmem:[%s3] sm:$0x1]
    %v153 = vperm.slane %v151, 0
    %v157 = vunpack.c.l.b16 %v133
    %v158 = vunpack.c.l.b16 %v134
    %v159 = vpack.c.b16 %v158, %v157
    %v177 = vunpack.c.l.b16 %v135
    %v178 = vunpack.c.l.b16 %v136
    %v179 = vunpack.c.l.b16 %v137
    %v180 = vunpack.c.l.b16 %v138
    %v181 = vunpack.c.l.b16 %v139
    %v182 = vunpack.c.l.b16 %v140
    %v183 = vunpack.c.l.b16 %v141
    %v184 = vunpack.c.l.b16 %v142
    %v185 = vunpack.c.l.b16 %v143
    %v186 = vunpack.c.l.b16 %v144
    %v187 = vunpack.c.l.b16 %v145
    %v188 = vunpack.c.l.b16 %v146
    %v189 = vunpack.c.l.b16 %v147
    %v190 = vunpack.c.l.b16 %v148
    %v191 = vunpack.c.l.b16 %v149
    %v192 = vunpack.c.l.b16 %v150
    %v193 = vpack.c.b16 %v178, %v177
    %v194 = vpack.c.b16 %v180, %v179
    %v195 = vpack.c.b16 %v182, %v181
    %v196 = vpack.c.b16 %v184, %v183
    %v197 = vpack.c.b16 %v186, %v185
    %v198 = vpack.c.b16 %v188, %v187
    %v199 = vpack.c.b16 %v190, %v189
    %v200 = vpack.c.b16 %v192, %v191
    %209 = vmatpush.bf16.msra.mxu0 %v200
    %210 = vmatpush.bf16.msra.mxu0 %v199
    %211 = vmatpush.bf16.msra.mxu0 %v198
    %212 = vmatpush.bf16.msra.mxu0 %v197
    %213 = vmatpush.bf16.msra.mxu0 %v196
    %214 = vmatpush.bf16.msra.mxu0 %v195
    %215 = vmatpush.bf16.msra.mxu0 %v194
    %216 = vmatpush.bf16.msra.mxu0 %v193
    %217 = vmatmul.bf16.gmra.mxu0 %v159
    %v218 = vpop.f32.mrf.mxu0
    %v219 = vadd.f32 %v153, %v218
    %v220 = vpop.f32.mrf.mxu0
    %v221 = vadd.f32 %v153, %v220
    %222 = vdwg.mxu0
    %v223 = vmax.f32 %v219, 0.0
    %v224 = vmax.f32 %v221, 0.0
    %v225 = vpack.c.bf16 %v224, %v223
    %v226 = vld [vmem:[#allocation8] sm:$0xff]
    %v227 = vld [vmem:[#allocation8 + $0x8] sm:$0xff]
    %v228 = vld [vmem:[#allocation8 + $0x10] sm:$0xff]
    %v229 = vld [vmem:[#allocation8 + $0x18] sm:$0xff]
    %v230 = vld [vmem:[#allocation8 + $0x20] sm:$0xff]
    %v231 = vld [vmem:[#allocation8 + $0x28] sm:$0xff]
    %v232 = vld [vmem:[#allocation8 + $0x30] sm:$0xff]
    %v233 = vld [vmem:[#allocation8 + $0x38] sm:$0xff]
    %v234 = vld [vmem:[#allocation8 + $0x40] sm:$0xff]
    %v235 = vld [vmem:[#allocation8 + $0x48] sm:$0xff]
    %v236 = vld [vmem:[#allocation8 + $0x50] sm:$0xff]
    %v237 = vld [vmem:[#allocation8 + $0x58] sm:$0xff]
    %v238 = vld [vmem:[#allocation8 + $0x60] sm:$0xff]
    %v239 = vld [vmem:[#allocation8 + $0x68] sm:$0xff]
    %v240 = vld [vmem:[#allocation8 + $0x70] sm:$0xff]
    %v241 = vld [vmem:[#allocation8 + $0x78] sm:$0xff]
    %v242 = vld [vmem:[%s5] sm:$0x3]
    %v244 = vperm.slane %v242, 0
    %v245 = vperm.slane %v242, 1
    %v264 = vunpack.c.l.b16 %v226
    %v265 = vunpack.c.h.b16 %v226
    %v266 = vunpack.c.l.b16 %v227
    %v267 = vunpack.c.h.b16 %v227
    %v268 = vunpack.c.l.b16 %v228
    %v269 = vunpack.c.h.b16 %v228
    %v270 = vunpack.c.l.b16 %v229
    %v271 = vunpack.c.h.b16 %v229
    %v272 = vunpack.c.l.b16 %v230
    %v273 = vunpack.c.h.b16 %v230
    %v274 = vunpack.c.l.b16 %v231
    %v275 = vunpack.c.h.b16 %v231
    %v276 = vunpack.c.l.b16 %v232
    %v277 = vunpack.c.h.b16 %v232
    %v278 = vunpack.c.l.b16 %v233
    %v279 = vunpack.c.h.b16 %v233
    %v280 = vunpack.c.l.b16 %v234
    %v281 = vunpack.c.h.b16 %v234
    %v282 = vunpack.c.l.b16 %v235
    %v283 = vunpack.c.h.b16 %v235
    %v284 = vunpack.c.l.b16 %v236
    %v285 = vunpack.c.h.b16 %v236
    %v286 = vunpack.c.l.b16 %v237
    %v287 = vunpack.c.h.b16 %v237
    %v288 = vunpack.c.l.b16 %v238
    %v289 = vunpack.c.h.b16 %v238
    %v290 = vunpack.c.l.b16 %v239
    %v291 = vunpack.c.h.b16 %v239
    %v292 = vunpack.c.l.b16 %v240
    %v293 = vunpack.c.h.b16 %v240
    %v294 = vunpack.c.l.b16 %v241
    %v295 = vunpack.c.h.b16 %v241
    %v296 = vpack.c.b16 %v266, %v264
    %v297 = vpack.c.b16 %v267, %v265
    %v298 = vpack.c.b16 %v270, %v268
    %v299 = vpack.c.b16 %v271, %v269
    %v300 = vpack.c.b16 %v274, %v272
    %v301 = vpack.c.b16 %v275, %v273
    %v302 = vpack.c.b16 %v278, %v276
    %v303 = vpack.c.b16 %v279, %v277
    %v304 = vpack.c.b16 %v282, %v280
    %v305 = vpack.c.b16 %v283, %v281
    %v306 = vpack.c.b16 %v286, %v284
    %v307 = vpack.c.b16 %v287, %v285
    %v308 = vpack.c.b16 %v290, %v288
    %v309 = vpack.c.b16 %v291, %v289
    %v310 = vpack.c.b16 %v294, %v292
    %v311 = vpack.c.b16 %v295, %v293
    %328 = vmatpush.bf16.msra.mxu0 %v310
    %329 = vmatpush.bf16.msra.mxu0 %v308
    %330 = vmatpush.bf16.msra.mxu0 %v306
    %331 = vmatpush.bf16.msra.mxu0 %v304
    %332 = vmatpush.bf16.msra.mxu0 %v302
    %333 = vmatpush.bf16.msra.mxu0 %v300
    %334 = vmatpush.bf16.msra.mxu0 %v298
    %335 = vmatpush.bf16.msra.mxu0 %v296
    %336 = vmatmul.bf16.gmra.mxu0 %v225
    %v337 = vpop.f32.mrf.mxu0
    %v338 = vadd.f32 %v244, %v337
    %v339 = vpop.f32.mrf.mxu0
    %v340 = vadd.f32 %v244, %v339
    %341 = vdwg.mxu0
    %342 = vmatpush.bf16.msra.mxu0 %v311
    %343 = vmatpush.bf16.msra.mxu0 %v309
    %344 = vmatpush.bf16.msra.mxu0 %v307
    %345 = vmatpush.bf16.msra.mxu0 %v305
    %346 = vmatpush.bf16.msra.mxu0 %v303
    %347 = vmatpush.bf16.msra.mxu0 %v301
    %348 = vmatpush.bf16.msra.mxu0 %v299
    %349 = vmatpush.bf16.msra.mxu0 %v297
    %350 = vmatmul.bf16.gmra.mxu0 %v225
    %v351 = vpop.f32.mrf.mxu0
    %v352 = vadd.f32 %v245, %v351
    %v353 = vpop.f32.mrf.mxu0
    %v354 = vadd.f32 %v245, %v353
    %355 = vdwg.mxu0
    %v356 = vmul.f32 %v352, 0.5
    %v357 = vmul.f32 %v354, 0.5
    %v358 = vmul.f32 %v356, 1.442695
    %v359 = vpow.pop %v358
    %v360 = vmul.f32 %v357, 1.442695
    %v361 = vpow.pop %v360
    %v362 = vld [vmem:[#allocation5] sm:$0xf]
    %v363 = vld [vmem:[#allocation5 + $0x4] sm:$0xf]
    %v364 = vunpack.c.l.bf16 %v362
    %v365 = vunpack.c.l.bf16 %v363
    %v366 = vmul.f32 %v364, %v359
    %v367 = vmul.f32 %v365, %v361
    %v368 = vadd.f32 %v366, %v338
    %v369 = vadd.f32 %v367, %v340
    %370 = vst [vmem:[#allocation14] sm:$0xff] %v368
    %371 = vst [vmem:[#allocation14 + $0x8] sm:$0xff] %v369
    %v372 = vpack.c.bf16 %v369, %v368
    %v373 = vld [vmem:[#allocation10] sm:$0xf]
    %v374 = vld [vmem:[#allocation10 + $0x4] sm:$0xf]
    %v375 = vld [vmem:[#allocation10 + $0x8] sm:$0xf]
    %v376 = vld [vmem:[#allocation10 + $0xc] sm:$0xf]
    %v377 = vld [vmem:[#allocation10 + $0x10] sm:$0xf]
    %v378 = vld [vmem:[#allocation10 + $0x14] sm:$0xf]
    %v379 = vld [vmem:[#allocation10 + $0x18] sm:$0xf]
    %v380 = vld [vmem:[#allocation10 + $0x1c] sm:$0xf]
    %v381 = vld [vmem:[#allocation10 + $0x20] sm:$0xf]
    %v382 = vld [vmem:[#allocation10 + $0x24] sm:$0xf]
    %v383 = vld [vmem:[#allocation10 + $0x28] sm:$0xf]
    %v384 = vld [vmem:[#allocation10 + $0x2c] sm:$0xf]
    %v385 = vld [vmem:[#allocation10 + $0x30] sm:$0xf]
    %v386 = vld [vmem:[#allocation10 + $0x34] sm:$0xf]
    %v387 = vld [vmem:[#allocation10 + $0x38] sm:$0xf]
    %v388 = vld [vmem:[#allocation10 + $0x3c] sm:$0xf]
    %v389 = vld [vmem:[%s7] sm:$0x1]
    %v391 = vperm.slane %v389, 0
    %v409 = vunpack.c.l.b16 %v373
    %v410 = vunpack.c.l.b16 %v374
    %v411 = vunpack.c.l.b16 %v375
    %v412 = vunpack.c.l.b16 %v376
    %v413 = vunpack.c.l.b16 %v377
    %v414 = vunpack.c.l.b16 %v378
    %v415 = vunpack.c.l.b16 %v379
    %v416 = vunpack.c.l.b16 %v380
    %v417 = vunpack.c.l.b16 %v381
    %v418 = vunpack.c.l.b16 %v382
    %v419 = vunpack.c.l.b16 %v383
    %v420 = vunpack.c.l.b16 %v384
    %v421 = vunpack.c.l.b16 %v385
    %v422 = vunpack.c.l.b16 %v386
    %v423 = vunpack.c.l.b16 %v387
    %v424 = vunpack.c.l.b16 %v388
    %v425 = vpack.c.b16 %v410, %v409
    %v426 = vpack.c.b16 %v412, %v411
    %v427 = vpack.c.b16 %v414, %v413
    %v428 = vpack.c.b16 %v416, %v415
    %v429 = vpack.c.b16 %v418, %v417
    %v430 = vpack.c.b16 %v420, %v419
    %v431 = vpack.c.b16 %v422, %v421
    %v432 = vpack.c.b16 %v424, %v423
    %441 = vmatpush.bf16.msra.mxu0 %v432
    %442 = vmatpush.bf16.msra.mxu0 %v431
    %443 = vmatpush.bf16.msra.mxu0 %v430
    %444 = vmatpush.bf16.msra.mxu0 %v429
    %445 = vmatpush.bf16.msra.mxu0 %v428
    %446 = vmatpush.bf16.msra.mxu0 %v427
    %447 = vmatpush.bf16.msra.mxu0 %v426
    %448 = vmatpush.bf16.msra.mxu0 %v425
    %449 = vmatmul.bf16.gmra.mxu0 %v372
    %v450 = vpop.f32.mrf.mxu0
    %v451 = vadd.f32 %v391, %v450
    %v452 = vpop.f32.mrf.mxu0
    %v453 = vadd.f32 %v391, %v452
    %454 = vdwg.mxu0
    %v455 = vmax.f32 %v451, 0.0
    %v456 = vmax.f32 %v453, 0.0
    %v457 = vpack.c.bf16 %v456, %v455
    %v458 = vld [vmem:[#allocation11] sm:$0xf]
    %v459 = vld [vmem:[#allocation11 + $0x4] sm:$0xf]
    %v460 = vld [vmem:[#allocation11 + $0x8] sm:$0xf]
    %v461 = vld [vmem:[#allocation11 + $0xc] sm:$0xf]
    %v462 = vld [vmem:[#allocation11 + $0x10] sm:$0xf]
    %v463 = vld [vmem:[#allocation11 + $0x14] sm:$0xf]
    %v464 = vld [vmem:[#allocation11 + $0x18] sm:$0xf]
    %v465 = vld [vmem:[#allocation11 + $0x1c] sm:$0xf]
    %v466 = vld [vmem:[#allocation11 + $0x20] sm:$0xf]
    %v467 = vld [vmem:[#allocation11 + $0x24] sm:$0xf]
    %v468 = vld [vmem:[#allocation11 + $0x28] sm:$0xf]
    %v469 = vld [vmem:[#allocation11 + $0x2c] sm:$0xf]
    %v470 = vld [vmem:[#allocation11 + $0x30] sm:$0xf]
    %v471 = vld [vmem:[#allocation11 + $0x34] sm:$0xf]
    %v472 = vld [vmem:[#allocation11 + $0x38] sm:$0xf]
    %v473 = vld [vmem:[#allocation11 + $0x3c] sm:$0xf]
    %v474 = vld [vmem:[%s9] sm:$0x1]
    %v476 = vperm.slane %v474, 0
    %v494 = vunpack.c.l.b16 %v458
    %v495 = vunpack.c.l.b16 %v459
    %v496 = vunpack.c.l.b16 %v460
    %v497 = vunpack.c.l.b16 %v461
    %v498 = vunpack.c.l.b16 %v462
    %v499 = vunpack.c.l.b16 %v463
    %v500 = vunpack.c.l.b16 %v464
    %v501 = vunpack.c.l.b16 %v465
    %v502 = vunpack.c.l.b16 %v466
    %v503 = vunpack.c.l.b16 %v467
    %v504 = vunpack.c.l.b16 %v468
    %v505 = vunpack.c.l.b16 %v469
    %v506 = vunpack.c.l.b16 %v470
    %v507 = vunpack.c.l.b16 %v471
    %v508 = vunpack.c.l.b16 %v472
    %v509 = vunpack.c.l.b16 %v473
    %v510 = vpack.c.b16 %v495, %v494
    %v511 = vpack.c.b16 %v497, %v496
    %v512 = vpack.c.b16 %v499, %v498
    %v513 = vpack.c.b16 %v501, %v500
    %v514 = vpack.c.b16 %v503, %v502
    %v515 = vpack.c.b16 %v505, %v504
    %v516 = vpack.c.b16 %v507, %v506
    %v517 = vpack.c.b16 %v509, %v508
    %526 = vmatpush.bf16.msra.mxu0 %v517
    %527 = vmatpush.bf16.msra.mxu0 %v516
    %528 = vmatpush.bf16.msra.mxu0 %v515
    %529 = vmatpush.bf16.msra.mxu0 %v514
    %530 = vmatpush.bf16.msra.mxu0 %v513
    %531 = vmatpush.bf16.msra.mxu0 %v512
    %532 = vmatpush.bf16.msra.mxu0 %v511
    %533 = vmatpush.bf16.msra.mxu0 %v510
    %534 = vmatmul.bf16.gmra.mxu0 %v457
    %v535 = vpop.f32.mrf.mxu0
    %v536 = vadd.f32 %v476, %v535
    %v537 = vpop.f32.mrf.mxu0
    %v538 = vadd.f32 %v476, %v537
    %539 = vdwg.mxu0
    %v540 = vxor.u32 %v536, 2147483648
    %v541 = vxor.u32 %v538, 2147483648
    %v542 = vmul.f32 %v540, 1.442695
    %v543 = vpow.pop %v542
    %v544 = vmul.f32 %v541, 1.442695
    %v545 = vpow.pop %v544
    %v546 = vadd.f32 %v543, 1.0
    %v547 = vadd.f32 %v545, 1.0
    %v548 = vrcp.pop %v546
    %v549 = vmul.f32 %v546, %v548
    %v550 = vsub.f32 1.0, %v549
    %v551 = vmul.f32 %v548, %v550
    %v552 = vadd.f32 %v548, %v551
    %vm553 = vweird.f32 %v546
    %vm554 = vweird.f32 %v548
    %vm555 = vmor %vm553, %vm554
    %v556 = vsel %vm555, %v548, %v552
    %v557 = vand.u32 2147483647, %v546
    %vm558 = vcmp.eq.f32.partialorder %v557, 8.507059e+37
    %v559 = vand.u32 %v546, 2147483648
    %v560 = vor.u32 1.1754944e-38, %v559
    %v561 = vsel %vm558, %v560, %v556
    %v562 = vmul.f32 1.0, %v561
    %v563 = vrcp.pop %v547
    %v564 = vmul.f32 %v547, %v563
    %v565 = vsub.f32 1.0, %v564
    %v566 = vmul.f32 %v563, %v565
    %v567 = vadd.f32 %v563, %v566
    %vm568 = vweird.f32 %v547
    %vm569 = vweird.f32 %v563
    %vm570 = vmor %vm568, %vm569
    %v571 = vsel %vm570, %v563, %v567
    %v572 = vand.u32 2147483647, %v547
    %vm573 = vcmp.eq.f32.partialorder %v572, 8.507059e+37
    %v574 = vand.u32 %v547, 2147483648
    %v575 = vor.u32 1.1754944e-38, %v574
    %v576 = vsel %vm573, %v575, %v571
    %v577 = vmul.f32 1.0, %v576
    %v578 = vpack.c.bf16 %v562, %v562
    %v579 = vpack.c.bf16 %v577, %v577
    %580 = vst [vmem:[#allocation13] sm:$0xf] %v578
    %581 = vst [vmem:[#allocation13 + $0x4] sm:$0xf] %v579
    // Predicated region
    $region66: #{tpu_custom_call.1} parent=1 // pred_check
      _
    $region67: #{tpu_custom_call.1} parent=1 // pred_check_branch
      %583 = sbr.rel (0) target = $region69
    $region68: #{tpu_custom_call.1} parent=1 // pred_region
      %585 = vsyncadd [#allocation4], 0
      %s586 = sshll.u32 [#allocation13], 4
      %s587 = int_to_ptr.vmem [resolvable:$true] %s586
      %s588 = sshll.u32 %s10, 4
      %s589 = int_to_ptr.hbm [resolvable:$true] %s588
      %594 = dma.vmem_to_hbm [thread:$0]  %s587, 128, %s589, [#allocation4], 64, 64, 4
    $region69: #{tpu_custom_call.1} parent=1 // pred_fallthru
      _
    // Predicated region
    $region70: #{tpu_custom_call.1} parent=1 // pred_check
      _
    $region71: #{tpu_custom_call.1} parent=1 // pred_check_branch
      %596 = sbr.rel (0) target = $region73
    $region72: #{tpu_custom_call.1} parent=1 // pred_region
      %598 = vsyncadd [#allocation15], 0
      %s599 = sshll.u32 [#allocation14], 4
      %s600 = int_to_ptr.vmem [resolvable:$true] %s599
      %s601 = sshll.u32 %s11, 4
      %s602 = int_to_ptr.hbm [resolvable:$true] %s601
      %607 = dma.vmem_to_hbm [thread:$0]  %s600, 256, %s602, [#allocation15], 128, 128, 8
    $region73: #{tpu_custom_call.1} parent=1 // pred_fallthru
      _
    // Predicated region
    $region74: #{tpu_custom_call.1} parent=1 // pred_check
      _
    $region75: #{tpu_custom_call.1} parent=1 // pred_check_branch
      %609 = sbr.rel (0) target = $region77
    $region76: #{tpu_custom_call.1} parent=1 // pred_region
      %611 = dma.done [#allocation4], 128
    $region77: #{tpu_custom_call.1} parent=1 // pred_fallthru
      _
    // Predicated region
    $region78: #{tpu_custom_call.1} parent=1 // pred_check
      _
    $region79: #{tpu_custom_call.1} parent=1 // pred_check_branch
      %613 = sbr.rel (0) target = $region81
    $region80: #{tpu_custom_call.1} parent=1 // pred_region
      %615 = dma.done [#allocation15], 256
    $region81: #{tpu_custom_call.1} parent=1 // pred_fallthru
      _
    %616 = vsyncpa [#allocation3], 1
    %617 = vsyncpa [#allocation6], 1
    %618 = vsyncpa [#allocation9], 1
    %619 = vsyncpa [#allocation12], 1
    %620 = vsyncpa [#allocation4], 1
    %621 = vsyncpa [#allocation15], 1

</llo_original>
